<compile_context>
chip_gen: v7x
topology: tpu7x:2x2x1
jax: 0.10.0
libtpu: 0.0.40
codegen_flags: <defaults>
</compile_context>

<pallas_src>
import functools
import math

import jax
import jax.numpy as jnp
import numpy as np
from jax.experimental import pallas as pl
from jax.experimental.pallas import tpu as pltpu

_LANE_CANDIDATES = (512, 256, 128)   # lane-dense widths (multiples of 128)
_TARGET_TILE_BYTES = 1 << 20         # ~1 MiB f32 tiles; in+out double-buffered
                                     # stays well under v5e's 16 MiB scoped VMEM
_LN2 = math.log(2.0)


# ---------------------------------------------------------------------------
# Layout helpers
# ---------------------------------------------------------------------------
def _choose_layout(n):
    """(lanes, rows, pad): lane-dense 2D slab, rows % 8 == 0, rows*lanes == n+pad."""
    for lanes in _LANE_CANDIDATES:
        if n % lanes == 0 and (n // lanes) % 8 == 0:
            return lanes, n // lanes, 0
    # Ragged element count: minimal pad to an (8, 128) multiple.
    # TODO(synk): handle the ragged tail with an in-kernel masked final block
    # instead of this pad + slice round trip (costs one extra HBM copy).
    lanes = 128
    rows = pl.cdiv(n, 8 * lanes) * 8
    return lanes, rows, rows * lanes - n


def _as_2d(x):
    """View x as a lane-dense (rows, lanes) slab (copy-free unless ragged)."""
    n = x.size
    lanes, rows, pad = _choose_layout(n)
    if pad == 0:
        return x.reshape(rows, lanes), n, False
    flat = jnp.concatenate([x.reshape(-1), jnp.ones((pad,), x.dtype)])
    return flat.reshape(rows, lanes), n, True


def _choose_row_tile(rows, lanes):
    """Largest multiple-of-8 row tile with tile bytes <= _TARGET_TILE_BYTES."""
    max_rt = max(8, (_TARGET_TILE_BYTES // (lanes * 4)) // 8 * 8)
    return min(rows, max_rt)


# ---------------------------------------------------------------------------
# Kernel 1: global max of |log(|x|)| via running max/min of |x|
# ---------------------------------------------------------------------------
def _minmax_abs_kernel(x_ref, o_ref, max_ref, min_ref, *,
                       rows, row_tile, per_core, num_blocks):
    i = pl.program_id(1)            # reduction axis ("arbitrary"), per core

    @pl.when(i == 0)
    def _():
        max_ref[...] = jnp.zeros_like(max_ref)                        # |x| >= 0
        min_ref[...] = jnp.full(min_ref.shape, jnp.inf, min_ref.dtype)

    # Global block index; the clamped overhang block may be revisited on the
    # second core -- max/min are idempotent, so that is harmless.
    blk = jnp.minimum(pl.program_id(0) * per_core + i, num_blocks - 1)

    rt, lanes = x_ref.shape
    has_partial_block = (rows % row_tile) != 0
    m = None
    mn = None
    # Fold the tile onto an (8, lanes) running max/min 8 rows at a time:
    # aligned static slices of the ref, pure VPU, no XLU, no transcendentals,
    # tiny scratch traffic per step (feedback #1 / #8).
    for k in range(rt // 8):
        a = jnp.abs(x_ref[k * 8:(k + 1) * 8, :].astype(jnp.float32))
        if has_partial_block:
            # Mask rows past the end of the slab with the neutral 1.0
            # (|log 1| = 0 never exceeds the true max of |log|x||).
            rid = (blk * row_tile + k * 8
                   + jax.lax.broadcasted_iota(jnp.int32, (8, 1), 0))
            a = jnp.where(rid < rows, a, 1.0)
        if k == 0:
            m, mn = a, a
        else:
            m = jnp.maximum(m, a)
            mn = jnp.minimum(mn, a)
    max_ref[...] = jnp.maximum(max_ref[...], m)
    min_ref[...] = jnp.minimum(min_ref[...], mn)

    @pl.when(i == pl.num_programs(1) - 1)
    def _():
        # max(|log|x||) == max(log(max|x|), -log(min|x|)); these 2*(8*lanes)
        # logs at finalize are the only EUP work in the whole pass.
        v = jnp.max(jnp.maximum(jnp.log(max_ref[...]), -jnp.log(min_ref[...])))
        o_ref[...] = jnp.full(o_ref.shape, v, jnp.float32)


def _max_abs_log_abs(x2d):
    """Device scalar: max(|log(|x|)|) over the whole slab."""
    rows, lanes = x2d.shape
    rt = _choose_row_tile(rows, lanes)
    num_blocks = pl.cdiv(rows, rt)
    n_cores = 2                      # megacore split on v7x; harmless elsewhere
    per_core = pl.cdiv(num_blocks, n_cores)

    kern = functools.partial(_minmax_abs_kernel, rows=rows, row_tile=rt,
                             per_core=per_core, num_blocks=num_blocks)
    out = pl.pallas_call(
        kern,
        out_shape=jax.ShapeDtypeStruct((8 * n_cores, 128), jnp.float32),
        grid_spec=pltpu.PrefetchScalarGridSpec(
            num_scalar_prefetch=0,
            grid=(n_cores, per_core),
            in_specs=[pl.BlockSpec(
                (rt, lanes),
                lambda c, i: (jnp.minimum(c * per_core + i, num_blocks - 1), 0))],
            out_specs=pl.BlockSpec((8, 128), lambda c, i: (c, 0)),
            scratch_shapes=[pltpu.VMEM((8, lanes), jnp.float32),
                            pltpu.VMEM((8, lanes), jnp.float32)],
        ),
        compiler_params=pltpu.CompilerParams(
            dimension_semantics=("parallel", "arbitrary")),
    )(x2d)
    return jnp.max(out)   # combine the two per-core partials (tiny)


# ---------------------------------------------------------------------------
# Kernel 2: elementwise log-domain linear quantization
# ---------------------------------------------------------------------------
def _log_quant_kernel(s_ref, x_ref, o_ref, *, min_val, max_val, linear_bits):
    x = x_ref[...].astype(jnp.float32)
    sgn = jnp.sign(x)
    if linear_bits == 1:          # linear_quantize(bits=1) -> sign(log|x|) - 1
        v = jnp.exp(jnp.sign(jnp.log(jnp.abs(x))) - 1.0)
    else:
        # exp2/log2 with ln2 folded into runtime SMEM scalars (feedback #4):
        #   s0 = ln2/delta   : floor(log2|x| * s0 + .5) == floor(log|x|/delta + .5)
        #   s1 = delta*log2e : exp2(clipped * s1)        == exp(clipped * delta)
        rounded = jnp.floor(jnp.log2(jnp.abs(x)) * s_ref[0] + 0.5)
        v = jnp.exp2(jnp.clip(rounded, min_val, max_val) * s_ref[1])
    o_ref[...] = (v * sgn).astype(o_ref.dtype)


def _log_quant_elementwise(scalars, x2d, *, min_val, max_val, linear_bits):
    rows, lanes = x2d.shape
    rt = _choose_row_tile(rows, lanes)
    kern = functools.partial(_log_quant_kernel, min_val=min_val,
                             max_val=max_val, linear_bits=linear_bits)
    # The (2,) f32 scale factors travel as a whole-array SMEM input (prefetched
    # once, no per-sf Mosaic recompile).  input_output_aliases is intentionally
    # not set: callers may still need x after quantization.
    return pl.pallas_call(
        kern,
        out_shape=jax.ShapeDtypeStruct(x2d.shape, x2d.dtype),
        grid_spec=pltpu.PrefetchScalarGridSpec(
            num_scalar_prefetch=0,
            grid=(pl.cdiv(rows, rt),),
            in_specs=[pl.BlockSpec(memory_space=pltpu.MemorySpace.SMEM),
                      pl.BlockSpec((rt, lanes), lambda i: (i, 0))],
            out_specs=pl.BlockSpec((rt, lanes), lambda i: (i, 0)),
        ),
        compiler_params=pltpu.CompilerParams(
            dimension_semantics=("parallel",)),
    )(scalars, x2d)


# ---------------------------------------------------------------------------
# Module-level functions (matching the torch reference semantics)
# ---------------------------------------------------------------------------
def _resolve_split_idx(overflow_rate, n):
    """int(overflow_rate * n) with PyTorch-style negative indexing.

    LogQuant.forward passes self.sf (often negative) as overflow_rate, exactly
    like the torch reference; torch indexes the descending-sorted tensor with
    that negative index, so we wrap it the same way instead of crashing."""
    raw = int(overflow_rate * n)
    idx = raw + n if raw < 0 else raw
    if not 0 <= idx < n:
        raise IndexError(
            "split index {} out of range for {} elements".format(raw, n))
    return idx


def _split_value(x, x2d, idx):
    """Host float: the idx-th largest |log(|x|)| (idx == 0 -> Pallas max/min pass)."""
    if idx == 0:
        return float(_max_abs_log_abs(x2d))
    # TODO(synk): the overflow_rate > 0 selection path stays in plain XLA
    # (per-element log + top_k); it is off the default (overflow_rate=0) path.
    abs_log = jnp.abs(jnp.log(jnp.abs(x.reshape(-1).astype(jnp.float32))))
    return float(jax.lax.top_k(abs_log, idx + 1)[0][idx])


def _compute_integral_part_of_log_abs(x, overflow_rate):
    """== compute_integral_part(log(abs(x)), overflow_rate) of the reference.

    NOTE: exact zeros in x drive the max to +inf and math.ceil raises, which is
    identical to the torch reference failure mode on this calibration path."""
    x2d, n, _ = _as_2d(x)
    v = _split_value(x, x2d, _resolve_split_idx(overflow_rate, n))
    return math.ceil(math.log2(v + 1e-12))


def log_linear_quantize(x, overflow_rate, bits):
    assert bits >= 1, bits
    if bits == 1:
        # degenerate 1-bit case: trivially elementwise, kept in plain JAX
        return jnp.sign(x)

    x2d, n, padded = _as_2d(x)
    v = _split_value(x, x2d, _resolve_split_idx(overflow_rate, n))

    # sf with host float64 math: exact parity with the torch/NumPy reference
    # (which also pulls v to the CPU here).  delta reaches the kernel as
    # runtime f32 scalars, so a new sf never triggers a Mosaic recompile.
    sf = bits - 1.0 - math.ceil(math.log2(v + 1e-12))
    delta = math.pow(2.0, -sf)
    scalars = jnp.array([_LN2 / delta, delta / _LN2], jnp.float32)

    linear_bits = bits - 1
    bound = math.pow(2.0, linear_bits - 1)
    out2d = _log_quant_elementwise(scalars, x2d, min_val=-bound,
                                   max_val=bound - 1.0,
                                   linear_bits=linear_bits)
    out = out2d.reshape(-1)
    if padded:
        out = out[:n]
    return out.reshape(x.shape)


class LogQuant:
    """JAX/Pallas port of the stateful torch LogQuant module."""

    def __init__(self, name, bits, sf=None, overflow_rate=0.0, counter=10):
        self.name = name
        self._counter = counter
        self.bits = bits
        self.sf = sf
        self.overflow_rate = overflow_rate

    @property
    def counter(self):
        return self._counter

    def __call__(self, x):
        if self._counter > 0:
            self._counter -= 1
            sf_new = self.bits - 1 - _compute_integral_part_of_log_abs(
                x, self.overflow_rate)
            self.sf = min(self.sf, sf_new) if self.sf is not None else sf_new
            return x
        # NOTE: exactly as in the reference code, self.sf is forwarded as the
        # `overflow_rate` argument of log_linear_quantize (bug-compatible).
        return log_linear_quantize(x, self.sf, self.bits)

    def __repr__(self):
        return "LogQuant(sf={}, bits={}, overflow_rate={:.3f}, counter={})".format(
            self.sf, self.bits, self.overflow_rate, self._counter)


# ---------------------------------------------------------------------------
# NumPy reference (for verification only)
# ---------------------------------------------------------------------------
def _ref_log_linear_quantize(x, overflow_rate, bits):
    x = np.asarray(x, np.float32)
    s = np.sign(x)
    x0 = np.log(np.abs(x))
    abs_v = np.sort(np.abs(x0).reshape(-1))[::-1]
    split_idx = int(overflow_rate * abs_v.shape[0])
    v = float(abs_v[split_idx])
    ci = math.ceil(math.log2(v + 1e-12))
    sf = bits - 1.0 - ci
    delta = 2.0 ** (-sf)
    bound = 2.0 ** (bits - 2)
    rounded = np.floor(x0 / delta + 0.5)
    clipped = np.clip(rounded, -bound, bound - 1) * delta
    return np.exp(clipped) * s


if __name__ == "__main__":
    key = jax.random.PRNGKey(0)
    x = jax.random.normal(key, (2, 4, 16, 16), dtype=jnp.float32)  # NCHW

    # Calibration phase (counter > 0): forward is identity, sf is estimated
    # via the Pallas max/min reduction kernel.
    q = LogQuant("act", bits=4, overflow_rate=0.0, counter=1)
    y_cal = jax.block_until_ready(q(x))
    assert q.counter == 0 and q.sf is not None
    assert np.allclose(np.asarray(y_cal), np.asarray(x))

    # Quantization phase (counter == 0).  The module forwards self.sf (which
    # may be negative) as overflow_rate -- this exercises the PyTorch-style
    # negative-index path that crashed previously.
    y_q = jax.block_until_ready(q(x))
    assert y_q.shape == x.shape and y_q.dtype == x.dtype

    # Explicit overflow_rate == 0 (deterministic max path) vs NumPy reference.
    q2 = LogQuant("act2", bits=4, sf=0.0, overflow_rate=0.0, counter=0)
    y_q2 = jax.block_until_ready(q2(x))
    ref = _ref_log_linear_quantize(np.asarray(x), 0.0, 4)
    np.testing.assert_allclose(np.asarray(y_q2), ref, rtol=1e-5, atol=1e-5)

    # Larger tensor: multi-block grid, odd block count (core-overhang clamp)
    # and a partial last block.  log|x| is snapped to a 1/32 grid offset by
    # 1/64 so floor(log|x|/delta + 0.5) can never straddle an integer boundary
    # between the TPU and NumPy transcendentals (keeps the element-exact
    # comparison meaningful).
    ku, ks = jax.random.split(jax.random.PRNGKey(1))
    u = jax.random.uniform(ku, (8, 66, 32, 32), jnp.float32,
                           minval=-9.0, maxval=9.0)
    u = jnp.round(u * 32.0) / 32.0 + 1.0 / 64.0
    sgn = jnp.where(jax.random.bernoulli(ks, 0.5, u.shape), 1.0, -1.0)
    xl = (sgn * jnp.exp(u)).astype(jnp.float32)
    y_l = jax.block_until_ready(log_linear_quantize(xl, 0.0, 4))
    ref_l = _ref_log_linear_quantize(np.asarray(xl), 0.0, 4)
    np.testing.assert_allclose(np.asarray(y_l), ref_l, rtol=1e-5, atol=1e-6)

    # Ragged element count: exercises the pad-with-ones fallback path.
    xr = jax.random.normal(jax.random.PRNGKey(2), (1, 3, 5, 7),
                           dtype=jnp.float32)
    y_r = jax.block_until_ready(log_linear_quantize(xr, 0.0, 4))
    ref_r = _ref_log_linear_quantize(np.asarray(xr), 0.0, 4)
    np.testing.assert_allclose(np.asarray(y_r), ref_r, rtol=1e-5, atol=1e-5)

    print("KERNEL_OK")
</pallas_src>

<mosaic_0001>
module attributes {stable_mosaic.version = 11 : i64} {
  func.func @_minmax_abs_kernel(%arg0: i32, %arg1: i32, %arg2: memref<8x256xf32, #tpu.memory_space<vmem>>, %arg3: memref<8x128xf32, #tpu.memory_space<vmem>>, %arg4: memref<8x256xf32, #tpu.memory_space<vmem>>, %arg5: memref<8x256xf32, #tpu.memory_space<vmem>>) attributes {dimension_semantics = [#tpu.dimension_semantics<parallel>, #tpu.dimension_semantics<arbitrary>], iteration_bounds = array<i64: 2, 1>, scalar_prefetch = 0 : i64, scratch_operands = 2 : i64, tpu.core_type = #tpu.core_type<tc>, window_params = [{transform_indices = @transform_0, window_bounds = array<i64: 8, 256>}, {transform_indices = @transform_1, window_bounds = array<i64: 8, 128>}]} {
    %c0_i32 = arith.constant 0 : i32
    %0 = arith.cmpi eq, %arg1, %c0_i32 : i32
    %1 = arith.extui %0 : i1 to i32
    %c0_i32_0 = arith.constant 0 : i32
    %2 = arith.cmpi ne, %1, %c0_i32_0 : i32
    scf.if %2 {
      %cst = arith.constant 0.000000e+00 : f32
      %14 = vector.broadcast %cst : f32 to vector<8x256xf32>
      %c0_12 = arith.constant 0 : index
      %c0_13 = arith.constant 0 : index
      %15 = vector.load %arg4[%c0_12, %c0_13] : memref<8x256xf32, #tpu.memory_space<vmem>>, vector<8x256xf32>
      tpu.vector_store %arg4[%c0_12, %c0_13], %14 {strides = array<i32>} : memref<8x256xf32, #tpu.memory_space<vmem>>, vector<8x256xf32>,
      %cst_14 = arith.constant 0x7F800000 : f32
      %16 = vector.broadcast %cst_14 : f32 to vector<8x256xf32>
      %c0_15 = arith.constant 0 : index
      %c0_16 = arith.constant 0 : index
      %17 = vector.load %arg5[%c0_15, %c0_16] : memref<8x256xf32, #tpu.memory_space<vmem>>, vector<8x256xf32>
      tpu.vector_store %arg5[%c0_15, %c0_16], %16 {strides = array<i32>} : memref<8x256xf32, #tpu.memory_space<vmem>>, vector<8x256xf32>,
    } else {
    }
    %c0 = arith.constant 0 : index
    %c0_1 = arith.constant 0 : index
    %3 = vector.load %arg2[%c0, %c0_1] : memref<8x256xf32, #tpu.memory_space<vmem>>, vector<8x256xf32>
    %4 = math.absf %3 : vector<8x256xf32>
    %c0_2 = arith.constant 0 : index
    %c0_3 = arith.constant 0 : index
    %5 = vector.load %arg4[%c0_2, %c0_3] : memref<8x256xf32, #tpu.memory_space<vmem>>, vector<8x256xf32>
    %6 = arith.maximumf %5, %4 : vector<8x256xf32>
    %c0_4 = arith.constant 0 : index
    %c0_5 = arith.constant 0 : index
    %7 = vector.load %arg4[%c0_4, %c0_5] : memref<8x256xf32, #tpu.memory_space<vmem>>, vector<8x256xf32>
    tpu.vector_store %arg4[%c0_4, %c0_5], %6 {strides = array<i32>} : memref<8x256xf32, #tpu.memory_space<vmem>>, vector<8x256xf32>,
    %c0_6 = arith.constant 0 : index
    %c0_7 = arith.constant 0 : index
    %8 = vector.load %arg5[%c0_6, %c0_7] : memref<8x256xf32, #tpu.memory_space<vmem>>, vector<8x256xf32>
    %9 = arith.minimumf %8, %4 : vector<8x256xf32>
    %c0_8 = arith.constant 0 : index
    %c0_9 = arith.constant 0 : index
    %10 = vector.load %arg5[%c0_8, %c0_9] : memref<8x256xf32, #tpu.memory_space<vmem>>, vector<8x256xf32>
    tpu.vector_store %arg5[%c0_8, %c0_9], %9 {strides = array<i32>} : memref<8x256xf32, #tpu.memory_space<vmem>>, vector<8x256xf32>,
    %c0_i32_10 = arith.constant 0 : i32
    %11 = arith.cmpi eq, %arg1, %c0_i32_10 : i32
    %12 = arith.extui %11 : i1 to i32
    %c0_i32_11 = arith.constant 0 : i32
    %13 = arith.cmpi ne, %12, %c0_i32_11 : i32
    scf.if %13 {
      %c0_12 = arith.constant 0 : index
      %c0_13 = arith.constant 0 : index
      %14 = vector.load %arg4[%c0_12, %c0_13] : memref<8x256xf32, #tpu.memory_space<vmem>>, vector<8x256xf32>
      %15 = math.log %14 : vector<8x256xf32>
      %c0_14 = arith.constant 0 : index
      %c0_15 = arith.constant 0 : index
      %16 = vector.load %arg5[%c0_14, %c0_15] : memref<8x256xf32, #tpu.memory_space<vmem>>, vector<8x256xf32>
      %17 = math.log %16 : vector<8x256xf32>
      %cst = arith.constant 0.000000e+00 : f32
      %18 = vector.broadcast %cst : f32 to vector<8x256xf32>
      %19 = arith.subf %18, %17 : vector<8x256xf32>
      %20 = arith.maximumf %15, %19 : vector<8x256xf32>
      %21 = vector.shape_cast %20 : vector<8x256xf32> to vector<1x8x256xf32>
      %cst_16 = arith.constant dense<0xFF800000> : vector<1xf32>
      %22 = vector.multi_reduction <maximumf>, %21, %cst_16 [1, 2] : vector<1x8x256xf32> to vector<1xf32>
      %23 = vector.shape_cast %22 : vector<1xf32> to vector<1x1x1xf32>
      %24 = vector.extract %23[0, 0, 0] : f32 from vector<1x1x1xf32>
      %25 = vector.broadcast %24 : f32 to vector<8x128xf32>
      %c0_17 = arith.constant 0 : index
      %c0_18 = arith.constant 0 : index
      %26 = vector.load %arg3[%c0_17, %c0_18] : memref<8x128xf32, #tpu.memory_space<vmem>>, vector<8x128xf32>
      tpu.vector_store %arg3[%c0_17, %c0_18], %25 {strides = array<i32>} : memref<8x128xf32, #tpu.memory_space<vmem>>, vector<8x128xf32>,
    } else {
    }
    return
  }
  func.func @transform_0(%arg0: i32, %arg1: i32) -> (i32, i32) {
    %c1_i32 = arith.constant 1 : i32
    %0 = arith.muli %arg0, %c1_i32 : i32
    %1 = arith.addi %0, %arg1 : i32
    %c0_i32 = arith.constant 0 : i32
    %2 = arith.minsi %1, %c0_i32 : i32
    %c0_i32_0 = arith.constant 0 : i32
    %c0_i32_1 = arith.constant 0 : i32
    return %2, %c0_i32_0 : i32, i32
  }
  func.func @transform_1(%arg0: i32, %arg1: i32) -> (i32, i32) {
    %c0_i32 = arith.constant 0 : i32
    %c0_i32_0 = arith.constant 0 : i32
    return %arg0, %c0_i32 : i32, i32
  }
}

</mosaic_0001>

<llo_original>
// kernel: tpu_custom_call.1
$region0: #{tpu_custom_call.1}
  #allocation0 [shape = 'u32[]', space=smem, size = 0x4, offset = 0x4, fixed_abs, tag = 'smem constant byte address 0x4 - core index']
  #allocation1 [shape = 'u32[144,128]{1,0:T(1,128)}', space=vmem, size = 0x12000, scoped, tag = 'internal scratch']
  #allocation2 [shape = 'f32[8,256]{1,0:T(8,128)}', space=vmem, size = 0x2000, scoped, tag = 'scratch operand']
  #allocation3 [shape = 'f32[8,256]{1,0:T(8,128)}', space=vmem, size = 0x2000, scoped, tag = 'scratch operand']
  %s0 = inlined_call_operand.hbm [shape: f32[8,256], index: 0, kind: input, shape index: {}]
  %s1 = inlined_call_operand.hbm [shape: f32[16,128], index: 1, kind: output, shape index: {}]
  %s2 = sld [smem:[#allocation0]]
  $region49: #{tpu_custom_call.1} parent=0
    _
  %s4 = ssub.s32 1, %s2
  %s5 = scalar_select 0, %s4, %s2
  $region1: #{tpu_custom_call.1} parent=0
    #allocation4 [shape = 'u8[16384]{0}', space=vmem, size = 0x4000, scoped, tag = 'input window, operand 0']
    #allocation5 [shape = 's32[2]{0}', space=sflag, size = 0x8, scoped, tag = 'scoped memory for tpu_custom_call.1']
    #allocation6 [shape = 's32[2]{0}', space=sflag, size = 0x8, scoped, tag = 'scoped memory for tpu_custom_call.1']
    #allocation7 [shape = 'u8[8192]{0}', space=vmem, size = 0x2000, scoped, tag = 'output window, operand 0']
    %6 = vsyncpa [#allocation5], 0
    %s7 = scalar_lea.sflag [#allocation5], 1
    %8 = vsyncpa %s7, 0
    %9 = vsyncpa [#allocation6], 0
    %s10 = scalar_lea.sflag [#allocation6], 1
    %11 = vsyncpa %s10, 0
    loop: start=0, step=1, limit=4
    $region2: #{tpu_custom_call.1} parent=1 // loop_pre_header
      _
    $region3: #{tpu_custom_call.1} parent=1 // loop_header
      %s13 = sphi 0, %s17
      %p14 = scmp.ge.s32.totalorder %s13, 4
      %s20 = sphi 0, %s32
      %s21 = sphi 0, %s28
      %s22 = sphi 0, %s20
      %s23 = sphi 0, %s21
      %s24 = sphi 0, %s22
      %s25 = sphi 0, %s23
      %s41 = sphi 0, %s43
      %s44 = sphi 0, %s41
      %s45 = sphi 0, %s44
      %s61 = sphi 0, %s45
      %s67 = sphi 0, %s69
      %s70 = sphi 0, %s67
      %s71 = sphi 0, %s70
      %s87 = sphi 0, %s71
    $region4: #{tpu_custom_call.1} parent=1 // loop_header_branch
      %16 = sbr.rel (%p14) target = $region8
    $region5: #{tpu_custom_call.1} parent=1 // loop_body
      %s18 = ssub.s32 %s13, 1
      %s19 = ssub.s32 %s13, 2
      %s26 = sadd.s32 1, %s21
      %p27 = scmp.ge.s32.totalorder %s26, 1
      %s28 = scalar_select %p27, 0, %s26
      %s29 = sadd.s32 1, %s20
      %s30 = scalar_select %p27, %s29, %s20
      %p31 = scmp.ge.s32.totalorder %s30, 2
      %s32 = scalar_select %p31, 0, %s30
      %s33 = sadd.s32 %s20, %s21
      %p34 = scmp.lt.s32.totalorder %s33, 0
      %s35 = scalar_select %p34, %s33, 0
      %s36 = sadd.s32 %s32, %s28
      %p37 = scmp.lt.s32.totalorder %s36, 0
      %s38 = scalar_select %p37, %s36, 0
      %s39 = ssub.s32 %s35, %s38
      %p40 = scmp.eq.s32.totalorder %s39, 0
      %s42 = sadd.s32 %s41, 1
      %s43 = scalar_select %p40, %s41, %s42
      %p46 = pneg %p40
      %p47 = scmp.eq.s32.totalorder %s13, 1
      %p48 = por %p46, %p47
      %p49 = scmp.ne.s32.totalorder %s41, %s44
      %p50 = scmp.eq.s32.totalorder %s13, 0
      %p51 = por %p49, %p50
      %p52 = scmp.ne.s32.totalorder %s41, %s44
      %p53 = scmp.eq.s32.totalorder %s18, 1
      %p54 = por %p52, %p53
      %p55 = scmp.ne.s32.totalorder %s44, %s45
      %p56 = scmp.eq.s32.totalorder %s18, 0
      %p57 = por %p55, %p56
      %p58 = scmp.ne.s32.totalorder %s44, %s45
      %p59 = scmp.eq.s32.totalorder %s19, 1
      %p60 = por %p58, %p59
      %p62 = scmp.ne.s32.totalorder %s45, %s61
      %p63 = scmp.eq.s32.totalorder %s19, 0
      %p64 = por %p62, %p63
      %s65 = ssub.s32 %s20, %s32
      %p66 = scmp.eq.s32.totalorder %s65, 0
      %s68 = sadd.s32 %s67, 1
      %s69 = scalar_select %p66, %s67, %s68
      %p72 = pneg %p66
      %p73 = scmp.eq.s32.totalorder %s13, 1
      %p74 = por %p72, %p73
      %p75 = scmp.ne.s32.totalorder %s67, %s70
      %p76 = scmp.eq.s32.totalorder %s13, 0
      %p77 = por %p75, %p76
      %p78 = scmp.ne.s32.totalorder %s67, %s70
      %p79 = scmp.eq.s32.totalorder %s18, 1
      %p80 = por %p78, %p79
      %p81 = scmp.ne.s32.totalorder %s70, %s71
      %p82 = scmp.eq.s32.totalorder %s18, 0
      %p83 = por %p81, %p82
      %p84 = scmp.ne.s32.totalorder %s70, %s71
      %p85 = scmp.eq.s32.totalorder %s19, 1
      %p86 = por %p84, %p85
      %p88 = scmp.ne.s32.totalorder %s71, %s87
      %p89 = scmp.eq.s32.totalorder %s19, 0
      %p90 = por %p88, %p89
      %p91 = scmp.le.s32.totalorder 1, %s13
      %p92 = scmp.lt.s32.totalorder %s13, 3
      %p93 = pnand %p91, %p92
      %p94 = pneg %p93
      // Predicated region
      $region9: #{tpu_custom_call.1} parent=5 // pred_check
        _
      $region10: #{tpu_custom_call.1} parent=5 // pred_check_branch
        %96 = sbr.rel (%p93) target = $region12
      $region11: #{tpu_custom_call.1} parent=5 // pred_region
        %s97 = ssub.s32 %s13, 1
      $region12: #{tpu_custom_call.1} parent=5 // pred_fallthru
        _
      %p98 = scmp.lt.s32.totalorder %s13, 2
      // Predicated region
      $region13: #{tpu_custom_call.1} parent=5 // pred_check
        %p99 = pneg %p98
      $region14: #{tpu_custom_call.1} parent=5 // pred_check_branch
        %101 = sbr.rel (%p99) target = $region16
      $region15: #{tpu_custom_call.1} parent=5 // pred_region
        // Predicated region
        $region17: #{tpu_custom_call.1} parent=15 // pred_check
          %p102 = pneg %p51
        $region18: #{tpu_custom_call.1} parent=15 // pred_check_branch
          %104 = sbr.rel (%p102) target = $region20
        $region19: #{tpu_custom_call.1} parent=15 // pred_region
          %s105 = sand.u32 %s41, 1
          %s106 = scalar_lea.sflag [#allocation5], %s105
          %s107 = sand.u32 %s41, 1
          %s108 = smul.addr %s107, 16
          %s109 = scalar_lea.vmem [#allocation4], %s108
          %s110 = sadd.s32 %s20, %s21
          %p111 = scmp.lt.s32.totalorder %s110, 0
          %s112 = scalar_select %p111, %s110, 0
          %s114 = ssub.s32 256, 256
          %115 = vsyncadd %s106, %s114
          %s116 = smul.addr %s112, 2
          %s117 = smul.addr %s116, 128
          %s118 = scalar_lea.hbm %s0, %s117
          %s120 = sshll.u32 %s109, 4
          %s121 = int_to_ptr.vmem [resolvable:$true] %s120
          %123 = dma.hbm_to_vmem [thread:$0]  %s118, 256, %s121, %s106
        $region20: #{tpu_custom_call.1} parent=15 // pred_fallthru
          _
      $region16: #{tpu_custom_call.1} parent=5 // pred_fallthru
        _
      %p124 = scmp.le.s32.totalorder 1, %s13
      %p125 = scmp.lt.s32.totalorder %s13, 3
      %p126 = pnand %p124, %p125
      %p127 = pneg %p126
      // Predicated region
      $region21: #{tpu_custom_call.1} parent=5 // pred_check
        _
      $region22: #{tpu_custom_call.1} parent=5 // pred_check_branch
        %129 = sbr.rel (%p126) target = $region24
      $region23: #{tpu_custom_call.1} parent=5 // pred_region
        %s130 = ssub.s32 %s13, 1
        %s131 = sand.u32 %s44, 1
        %s132 = scalar_lea.sflag [#allocation5], %s131
        %s133 = sand.u32 %s44, 1
        %s134 = smul.addr %s133, 16
        %s135 = scalar_lea.vmem [#allocation4], %s134
        // Predicated region
        $region25: #{tpu_custom_call.1} parent=23 // pred_check
          %p136 = pneg %p57
        $region26: #{tpu_custom_call.1} parent=23 // pred_check_branch
          %138 = sbr.rel (%p136) target = $region28
        $region27: #{tpu_custom_call.1} parent=23 // pred_region
          %139 = dma.done %s132, 256
        $region28: #{tpu_custom_call.1} parent=23 // pred_fallthru
          _
        %s140 = sand.u32 %s44, 1
        %s141 = scalar_lea.sflag [#allocation5], %s140
        %s142 = sand.u32 %s44, 1
        %s143 = smul.addr %s142, 16
        %s144 = scalar_lea.vmem [#allocation4], %s143
        %p145 = pneg %p57
        %p146 = pneg %p54
        %p147 = pneg %p83
        %p148 = pneg %p80
        %s149 = sand.u32 %s70, 1
        %s150 = scalar_lea.sflag [#allocation6], %s149
        %s151 = sand.u32 %s70, 1
        %s152 = smul.addr %s151, 8
        %s153 = scalar_lea.vmem [#allocation7], %s152
        %s154 = sadd.s32 %s22, %s23
        %p155 = scmp.lt.s32.totalorder %s154, 0
        %s156 = scalar_select %p155, %s154, 0
        %p157 = scmp.eq.s32.totalorder %s23, 0
        // Predicated region
        $region29: #{tpu_custom_call.1} parent=23 // pred_check
          %p158 = pneg %p157
        $region30: #{tpu_custom_call.1} parent=23 // pred_check_branch
          %160 = sbr.rel (%p158) target = $region32
        $region31: #{tpu_custom_call.1} parent=23 // pred_region
          %161 = vst [vmem:[#allocation2] sm:$0xff] 0.0
          %162 = vst [vmem:[#allocation2 + $0x8] sm:$0xff] 0.0
          %163 = vst [vmem:[#allocation3] sm:$0xff] inf
          %164 = vst [vmem:[#allocation3 + $0x8] sm:$0xff] inf
        $region32: #{tpu_custom_call.1} parent=23 // pred_fallthru
          _
        %v165 = vld [vmem:[%s135] sm:$0xff]
        %v166 = vld [vmem:[%s135 + $0x8] sm:$0xff]
        %v167 = vand.u32 2147483647, %v165
        %v168 = vand.u32 2147483647, %v166
        %v169 = vld [vmem:[#allocation2] sm:$0xff]
        %v170 = vld [vmem:[#allocation2 + $0x8] sm:$0xff]
        %v171 = vmax.f32 %v169, %v167
        %v172 = vmax.f32 %v170, %v168
        %173 = vst [vmem:[#allocation2] sm:$0xff] %v171
        %174 = vst [vmem:[#allocation2 + $0x8] sm:$0xff] %v172
        %v175 = vld [vmem:[#allocation3] sm:$0xff]
        %v176 = vld [vmem:[#allocation3 + $0x8] sm:$0xff]
        %v177 = vmin.f32 %v175, %v167
        %v178 = vmin.f32 %v176, %v168
        %179 = vst [vmem:[#allocation3] sm:$0xff] %v177
        %180 = vst [vmem:[#allocation3 + $0x8] sm:$0xff] %v178
        // Predicated region
        $region33: #{tpu_custom_call.1} parent=23 // pred_check
          %p181 = pneg %p157
        $region34: #{tpu_custom_call.1} parent=23 // pred_check_branch
          %183 = sbr.rel (%p181) target = $region36
        $region35: #{tpu_custom_call.1} parent=23 // pred_region
          %v184 = vld [vmem:[#allocation2] sm:$0xff]
          %v185 = vld [vmem:[#allocation2 + $0x8] sm:$0xff]
          %v186 = vlog2.pop %v184
          %v187 = vmul.f32 %v186, 0.6931472
          %v188 = vlog2.pop %v185
          %v189 = vmul.f32 %v188, 0.6931472
          %v190 = vld [vmem:[#allocation3] sm:$0xff]
          %v191 = vld [vmem:[#allocation3 + $0x8] sm:$0xff]
          %v192 = vlog2.pop %v190
          %v193 = vmul.f32 %v192, 0.6931472
          %v194 = vlog2.pop %v191
          %v195 = vmul.f32 %v194, 0.6931472
          %v196 = vsub.f32 0.0, %v193
          %v197 = vsub.f32 0.0, %v195
          %v198 = vmax.f32 %v187, %v196
          %v199 = vmax.f32 %v189, %v197
          %v200 = vmax.f32 %v198, %v199
          %201 = vmax.xlane.f32.xlu0 %v200
          %v202 = vpop.xlane.xlu0 %201
          %v203 = vrot.slane %v202, 4
          %v204 = vmax.f32 %v202, %v203
          %v205 = vrot.slane %v204, 2
          %v206 = vmax.f32 %v204, %v205
          %v207 = vrot.slane %v206, 1
          %v208 = vmax.f32 %v206, %v207
          %s209 = vtos %v208
          %v210 = vstv %s209
          %211 = vst [vmem:[%s153] sm:$0xff] %v210
        $region36: #{tpu_custom_call.1} parent=23 // pred_fallthru
          _
        %s212 = sand.u32 %s70, 1
        %s213 = scalar_lea.sflag [#allocation6], %s212
        %s214 = sand.u32 %s70, 1
        %s215 = smul.addr %s214, 8
        %s216 = scalar_lea.vmem [#allocation7], %s215
        // Predicated region
        $region37: #{tpu_custom_call.1} parent=23 // pred_check
          %p217 = pneg %p80
        $region38: #{tpu_custom_call.1} parent=23 // pred_check_branch
          %219 = sbr.rel (%p217) target = $region40
        $region39: #{tpu_custom_call.1} parent=23 // pred_region
          %s221 = ssub.s32 128, 128
          %222 = vsyncadd %s213, %s221
          %s223 = smul.addr %s22, 128
          %s224 = scalar_lea.hbm %s1, %s223
          %s226 = sshll.u32 %s216, 4
          %s227 = int_to_ptr.vmem [resolvable:$true] %s226
          %229 = dma.vmem_to_hbm [thread:$0]  %s227, 128, %s224, %s213
        $region40: #{tpu_custom_call.1} parent=23 // pred_fallthru
          _
      $region24: #{tpu_custom_call.1} parent=5 // pred_fallthru
        _
      %p230 = scmp.le.s32.totalorder 2, %s13
      // Predicated region
      $region41: #{tpu_custom_call.1} parent=5 // pred_check
        %p231 = pneg %p230
      $region42: #{tpu_custom_call.1} parent=5 // pred_check_branch
        %233 = sbr.rel (%p231) target = $region44
      $region43: #{tpu_custom_call.1} parent=5 // pred_region
        %s234 = ssub.s32 %s13, 2
        // Predicated region
        $region45: #{tpu_custom_call.1} parent=43 // pred_check
          %p235 = pneg %p86
        $region46: #{tpu_custom_call.1} parent=43 // pred_check_branch
          %237 = sbr.rel (%p235) target = $region48
        $region47: #{tpu_custom_call.1} parent=43 // pred_region
          %s238 = sand.u32 %s71, 1
          %s239 = scalar_lea.sflag [#allocation6], %s238
          %s240 = sand.u32 %s71, 1
          %s241 = smul.addr %s240, 8
          %s242 = scalar_lea.vmem [#allocation7], %s241
          %243 = dma.done %s239, 128
        $region48: #{tpu_custom_call.1} parent=43 // pred_fallthru
          _
      $region44: #{tpu_custom_call.1} parent=5 // pred_fallthru
        _
    $region6: #{tpu_custom_call.1} parent=1 // loop_footer
      %s17 = sadd.s32 1, %s13
    $region7: #{tpu_custom_call.1} parent=1 // loop_footer_branch
      %12 = sbr.rel target = $region3
    $region8: #{tpu_custom_call.1} parent=1 // loop_exit
      _
    %244 = vsyncpa [#allocation5], 1
    %s245 = scalar_lea.sflag [#allocation5], 1
    %246 = vsyncpa %s245, 1
    %247 = vsyncpa [#allocation6], 1
    %s248 = scalar_lea.sflag [#allocation6], 1
    %249 = vsyncpa %s248, 1

</llo_original>
